<compile_context>
chip_gen: v5e
topology: v5e:2x2
jax: 0.10.0
libtpu: 0.0.40
codegen_flags: <defaults>
</compile_context>

<pallas_src>
import jax
import jax.numpy as jnp
from jax import lax
from jax.experimental import pallas as pl
from jax.experimental.pallas import tpu as pltpu

B = 8           # batch size (self.args.batch_size)
C_IN = 4        # input channels (small stand-in for RGB)
H = W = 16      # spatial size
FEAT = 128      # backbone feature dim (lane-aligned stand-in for resnet18's 512)
PROJ = 128      # projector width (the 'proj' constructor argument)
LAMBD = 0.0051  # self.args.lambd (standard Barlow Twins value)
EPS = 1e-5      # nn.BatchNorm1d default eps
HW = H * W


# ---------------------------------------------------------------------------
# Fused kernel: backbone stand-in + projector + BN + cross-correlation + loss
# ---------------------------------------------------------------------------
def _fused_kernel(x_ref, wgap_ref,
                  w1_ref, g1_ref, b1_ref,
                  w2_ref, g2_ref, b2_ref,
                  w3_ref,
                  r_ref, loss_ref):
    # ---- backbone stand-in -------------------------------------------------
    # TODO(synk): the full torchvision ResNet-18 backbone (fc=Identity) is not
    # reimplemented; this deterministic stand-in is GAP + bias-free linear +
    # ReLU.  The 1/(H*W) GAP scale is pre-folded into w_gap so the whole
    # backbone is a single MXU matmul (keeps the XLU free for BN reductions).
    feat = jnp.dot(x_ref[...], wgap_ref[...], preferred_element_type=jnp.float32)
    feat = jnp.maximum(feat, 0.0)                      # (2B, FEAT); rows [0:B]=view1
    r_ref[...] = feat

    def bn_per_view(h, gamma, beta):
        # nn.BatchNorm1d in training mode (biased batch variance), computed
        # separately per view.  Reshape (2B,P)->(2,B,P) splits rows exactly at
        # the 8-sublane boundary (B=8), so one sublane reduction covers both
        # views at once.
        hv = h.reshape(2, B, h.shape[-1])
        mu = jnp.mean(hv, axis=1, keepdims=True)
        var = jnp.mean(jnp.square(hv - mu), axis=1, keepdims=True)
        out = (hv - mu) * lax.rsqrt(var + EPS) * gamma + beta
        return out.reshape(2 * B, h.shape[-1])

    # ---- projector (both views in one matmul per layer) ---------------------
    h = jnp.dot(feat, w1_ref[...], preferred_element_type=jnp.float32)
    h = jnp.maximum(bn_per_view(h, g1_ref[...], b1_ref[...]), 0.0)
    h = jnp.dot(h, w2_ref[...], preferred_element_type=jnp.float32)
    h = jnp.maximum(bn_per_view(h, g2_ref[...], b2_ref[...]), 0.0)
    z = jnp.dot(h, w3_ref[...], preferred_element_type=jnp.float32)   # (2B, PROJ)

    # ---- affine-free BatchNorm (self.bn) per view ---------------------------
    zv = z.reshape(2, B, PROJ)
    mu = jnp.mean(zv, axis=1, keepdims=True)
    var = jnp.mean(jnp.square(zv - mu), axis=1, keepdims=True)
    zn = (zv - mu) * lax.rsqrt(var + EPS)

    # c = bn(z1).T @ bn(z2) / batch_size  -> (PROJ, PROJ)
    c = lax.dot_general(zn[0], zn[1], (((0,), (0,)), ((), ())),
                        preferred_element_type=jnp.float32) * (1.0 / B)
    # TODO(synk): torch.distributed.all_reduce(c) skipped (single-device kernel).

    # ---- Barlow loss --------------------------------------------------------
    #   on_diag  = sum((diag(c)-1)^2) = sum_d(c^2) - 2*sum_d(c) + PROJ
    #   off_diag = sum(c^2) - sum_d(c^2)
    #   loss     = sum_d((1-l)*c^2 - 2c) + PROJ + l*sum(c^2)
    rows = lax.broadcasted_iota(jnp.int32, (PROJ, PROJ), 0)
    cols = lax.broadcasted_iota(jnp.int32, (PROJ, PROJ), 1)
    is_diag = rows == cols
    c2 = c * c
    total = jnp.sum(c2)
    diag_comb = jnp.sum(jnp.where(is_diag, (1.0 - LAMBD) * c2 - 2.0 * c, 0.0))
    loss_ref[0, 0] = diag_comb + float(PROJ) + LAMBD * total


def barlow_twins_forward(y1, y2, params):
    """Returns (r1, r2, loss) like BarlowTwins.forward."""
    # Stack both views along rows: rows [0:B] = view 1, rows [B:2B] = view 2.
    x = jnp.concatenate([y1.reshape(B, C_IN * HW),
                         y2.reshape(B, C_IN * HW)], axis=0)
    # Fold the global-average-pool scale into the stem weight:
    # w_gap[c*HW + s, f] = w_stem[c, f] / HW.  (In a real pipeline this would
    # be precomputed once, outside the training step.)
    w_gap = jnp.broadcast_to(params["w_stem"][:, None, :] * (1.0 / HW),
                             (C_IN, HW, FEAT)).reshape(C_IN * HW, FEAT)

    r, loss = pl.pallas_call(
        _fused_kernel,
        out_shape=(
            jax.ShapeDtypeStruct((2 * B, FEAT), jnp.float32),
            jax.ShapeDtypeStruct((1, 1), jnp.float32),
        ),
        grid=(1,),
        in_specs=[
            pl.BlockSpec((2 * B, C_IN * HW), lambda i: (0, 0)),   # x (both views)
            pl.BlockSpec((C_IN * HW, FEAT), lambda i: (0, 0)),    # w_gap
            pl.BlockSpec((FEAT, PROJ), lambda i: (0, 0)),         # w1
            pl.BlockSpec((1, PROJ), lambda i: (0, 0)),            # g1
            pl.BlockSpec((1, PROJ), lambda i: (0, 0)),            # b1
            pl.BlockSpec((PROJ, PROJ), lambda i: (0, 0)),         # w2
            pl.BlockSpec((1, PROJ), lambda i: (0, 0)),            # g2
            pl.BlockSpec((1, PROJ), lambda i: (0, 0)),            # b2
            pl.BlockSpec((PROJ, PROJ), lambda i: (0, 0)),         # w3
        ],
        out_specs=(
            pl.BlockSpec((2 * B, FEAT), lambda i: (0, 0)),        # stacked r1/r2
            pl.BlockSpec(memory_space=pltpu.MemorySpace.SMEM),    # scalar loss
        ),
        compiler_params=pltpu.CompilerParams(
            dimension_semantics=("arbitrary",)),
    )(x, w_gap,
      params["w1"], params["g1"], params["b1"],
      params["w2"], params["g2"], params["b2"],
      params["w3"])

    return r[:B], r[B:], loss[0, 0]


if __name__ == "__main__":
    key = jax.random.PRNGKey(0)
    ks = jax.random.split(key, 6)
    y1 = jax.random.normal(ks[0], (B, C_IN, H, W), jnp.float32)
    y2 = jax.random.normal(ks[1], (B, C_IN, H, W), jnp.float32)

    params = {
        "w_stem": jax.random.normal(ks[2], (C_IN, FEAT), jnp.float32) * 0.1,
        # projector: Linear(FEAT->PROJ, bias=False), BN1d, ReLU,
        #            Linear(PROJ->PROJ, bias=False), BN1d, ReLU,
        #            Linear(PROJ->PROJ, bias=False)
        "w1": jax.random.normal(ks[3], (FEAT, PROJ), jnp.float32) * (FEAT ** -0.5),
        "g1": jnp.ones((1, PROJ), jnp.float32),
        "b1": jnp.zeros((1, PROJ), jnp.float32),
        "w2": jax.random.normal(ks[4], (PROJ, PROJ), jnp.float32) * (PROJ ** -0.5),
        "g2": jnp.ones((1, PROJ), jnp.float32),
        "b2": jnp.zeros((1, PROJ), jnp.float32),
        "w3": jax.random.normal(ks[5], (PROJ, PROJ), jnp.float32) * (PROJ ** -0.5),
    }

    r1, r2, loss = barlow_twins_forward(y1, y2, params)
    jax.block_until_ready((r1, r2, loss))
    assert r1.shape == (B, FEAT) and r2.shape == (B, FEAT)
    assert loss.shape == () and jnp.isfinite(loss)
    print("KERNEL_OK")
</pallas_src>

<mosaic_0001>
module attributes {stable_mosaic.version = 11 : i64} {
  func.func @_fused_kernel(%arg0: i32, %arg1: memref<16x1024xf32, #tpu.memory_space<vmem>>, %arg2: memref<1024x128xf32, #tpu.memory_space<vmem>>, %arg3: memref<128x128xf32, #tpu.memory_space<vmem>>, %arg4: memref<1x128xf32, #tpu.memory_space<vmem>>, %arg5: memref<1x128xf32, #tpu.memory_space<vmem>>, %arg6: memref<128x128xf32, #tpu.memory_space<vmem>>, %arg7: memref<1x128xf32, #tpu.memory_space<vmem>>, %arg8: memref<1x128xf32, #tpu.memory_space<vmem>>, %arg9: memref<128x128xf32, #tpu.memory_space<vmem>>, %arg10: memref<16x128xf32, #tpu.memory_space<vmem>>, %arg11: memref<1x1xf32, #tpu.memory_space<smem>>) attributes {dimension_semantics = [#tpu.dimension_semantics<arbitrary>], iteration_bounds = array<i64: 1>, scalar_prefetch = 0 : i64, scratch_operands = 0 : i64, tpu.core_type = #tpu.core_type<tc>, window_params = [{pipeline_mode = #tpu.pipeline_mode<synchronous>, transform_indices = @transform_0, window_bounds = array<i64: 16, 1024>}, {pipeline_mode = #tpu.pipeline_mode<synchronous>, transform_indices = @transform_1, window_bounds = array<i64: 1024, 128>}, {pipeline_mode = #tpu.pipeline_mode<synchronous>, transform_indices = @transform_2, window_bounds = array<i64: 128, 128>}, {pipeline_mode = #tpu.pipeline_mode<synchronous>, transform_indices = @transform_3, window_bounds = array<i64: 1, 128>}, {pipeline_mode = #tpu.pipeline_mode<synchronous>, transform_indices = @transform_4, window_bounds = array<i64: 1, 128>}, {pipeline_mode = #tpu.pipeline_mode<synchronous>, transform_indices = @transform_5, window_bounds = array<i64: 128, 128>}, {pipeline_mode = #tpu.pipeline_mode<synchronous>, transform_indices = @transform_6, window_bounds = array<i64: 1, 128>}, {pipeline_mode = #tpu.pipeline_mode<synchronous>, transform_indices = @transform_7, window_bounds = array<i64: 1, 128>}, {pipeline_mode = #tpu.pipeline_mode<synchronous>, transform_indices = @transform_8, window_bounds = array<i64: 128, 128>}, {pipeline_mode = #tpu.pipeline_mode<synchronous>, transform_indices = @transform_9, window_bounds = array<i64: 16, 128>}, {transform_indices = @transform_10, window_bounds = array<i64: 1, 1>}]} {
    %c0 = arith.constant 0 : index
    %c0_0 = arith.constant 0 : index
    %0 = vector.load %arg1[%c0, %c0_0] : memref<16x1024xf32, #tpu.memory_space<vmem>>, vector<16x1024xf32>
    %c0_1 = arith.constant 0 : index
    %c0_2 = arith.constant 0 : index
    %1 = vector.load %arg2[%c0_1, %c0_2] : memref<1024x128xf32, #tpu.memory_space<vmem>>, vector<1024x128xf32>
    %cst = arith.constant dense<0.000000e+00> : vector<16x128xf32>
    %2 = tpu.matmul %0, %1, %cst {dimension_numbers = #tpu.dot_dimension_numbers<[1], [0], [0], [1], [0, 0, 1, 1], [], []>} : vector<16x1024xf32>, vector<1024x128xf32>, vector<16x128xf32> -> vector<16x128xf32>
    %cst_3 = arith.constant 0.000000e+00 : f32
    %3 = vector.broadcast %cst_3 : f32 to vector<16x128xf32>
    %4 = arith.maximumf %2, %3 : vector<16x128xf32>
    %c0_4 = arith.constant 0 : index
    %c0_5 = arith.constant 0 : index
    %5 = vector.load %arg10[%c0_4, %c0_5] : memref<16x128xf32, #tpu.memory_space<vmem>>, vector<16x128xf32>
    tpu.vector_store %arg10[%c0_4, %c0_5], %4 {strides = array<i32>} : memref<16x128xf32, #tpu.memory_space<vmem>>, vector<16x128xf32>,
    %c0_6 = arith.constant 0 : index
    %c0_7 = arith.constant 0 : index
    %6 = vector.load %arg3[%c0_6, %c0_7] : memref<128x128xf32, #tpu.memory_space<vmem>>, vector<128x128xf32>
    %cst_8 = arith.constant dense<0.000000e+00> : vector<16x128xf32>
    %7 = tpu.matmul %4, %6, %cst_8 {dimension_numbers = #tpu.dot_dimension_numbers<[1], [0], [0], [1], [0, 0, 1, 1], [], []>} : vector<16x128xf32>, vector<128x128xf32>, vector<16x128xf32> -> vector<16x128xf32>
    %c0_9 = arith.constant 0 : index
    %c0_10 = arith.constant 0 : index
    %8 = vector.load %arg4[%c0_9, %c0_10] : memref<1x128xf32, #tpu.memory_space<vmem>>, vector<1x128xf32>
    %c0_11 = arith.constant 0 : index
    %c0_12 = arith.constant 0 : index
    %9 = vector.load %arg5[%c0_11, %c0_12] : memref<1x128xf32, #tpu.memory_space<vmem>>, vector<1x128xf32>
    %10 = vector.shape_cast %7 : vector<16x128xf32> to vector<2x8x128xf32>
    %cst_13 = arith.constant dense<0.000000e+00> : vector<2x128xf32>
    %11 = vector.multi_reduction <add>, %10, %cst_13 [1] : vector<2x8x128xf32> to vector<2x128xf32>
    %12 = vector.shape_cast %11 : vector<2x128xf32> to vector<2x1x128xf32>
    %cst_14 = arith.constant 8.000000e+00 : f32
    %13 = vector.broadcast %cst_14 : f32 to vector<2x1x128xf32>
    %14 = arith.divf %12, %13 : vector<2x1x128xf32>
    %15 = vector.broadcast %14 : vector<2x1x128xf32> to vector<2x8x128xf32>
    %16 = arith.subf %10, %15 : vector<2x8x128xf32>
    %17 = arith.mulf %16, %16 : vector<2x8x128xf32>
    %cst_15 = arith.constant dense<0.000000e+00> : vector<2x128xf32>
    %18 = vector.multi_reduction <add>, %17, %cst_15 [1] : vector<2x8x128xf32> to vector<2x128xf32>
    %19 = vector.shape_cast %18 : vector<2x128xf32> to vector<2x1x128xf32>
    %cst_16 = arith.constant 8.000000e+00 : f32
    %20 = vector.broadcast %cst_16 : f32 to vector<2x1x128xf32>
    %21 = arith.divf %19, %20 : vector<2x1x128xf32>
    %22 = vector.broadcast %14 : vector<2x1x128xf32> to vector<2x8x128xf32>
    %23 = arith.subf %10, %22 : vector<2x8x128xf32>
    %cst_17 = arith.constant 9.99999974E-6 : f32
    %24 = vector.broadcast %cst_17 : f32 to vector<2x1x128xf32>
    %25 = arith.addf %21, %24 : vector<2x1x128xf32>
    %26 = math.rsqrt %25 : vector<2x1x128xf32>
    %27 = vector.broadcast %26 : vector<2x1x128xf32> to vector<2x8x128xf32>
    %28 = arith.mulf %23, %27 : vector<2x8x128xf32>
    %29 = vector.shape_cast %8 : vector<1x128xf32> to vector<1x1x128xf32>
    %30 = vector.broadcast %29 : vector<1x1x128xf32> to vector<2x8x128xf32>
    %31 = arith.mulf %28, %30 : vector<2x8x128xf32>
    %32 = vector.shape_cast %9 : vector<1x128xf32> to vector<1x1x128xf32>
    %33 = vector.broadcast %32 : vector<1x1x128xf32> to vector<2x8x128xf32>
    %34 = arith.addf %31, %33 : vector<2x8x128xf32>
    %35 = vector.shape_cast %34 : vector<2x8x128xf32> to vector<16x128xf32>
    %cst_18 = arith.constant 0.000000e+00 : f32
    %36 = vector.broadcast %cst_18 : f32 to vector<16x128xf32>
    %37 = arith.maximumf %35, %36 : vector<16x128xf32>
    %c0_19 = arith.constant 0 : index
    %c0_20 = arith.constant 0 : index
    %38 = vector.load %arg6[%c0_19, %c0_20] : memref<128x128xf32, #tpu.memory_space<vmem>>, vector<128x128xf32>
    %cst_21 = arith.constant dense<0.000000e+00> : vector<16x128xf32>
    %39 = tpu.matmul %37, %38, %cst_21 {dimension_numbers = #tpu.dot_dimension_numbers<[1], [0], [0], [1], [0, 0, 1, 1], [], []>} : vector<16x128xf32>, vector<128x128xf32>, vector<16x128xf32> -> vector<16x128xf32>
    %c0_22 = arith.constant 0 : index
    %c0_23 = arith.constant 0 : index
    %40 = vector.load %arg7[%c0_22, %c0_23] : memref<1x128xf32, #tpu.memory_space<vmem>>, vector<1x128xf32>
    %c0_24 = arith.constant 0 : index
    %c0_25 = arith.constant 0 : index
    %41 = vector.load %arg8[%c0_24, %c0_25] : memref<1x128xf32, #tpu.memory_space<vmem>>, vector<1x128xf32>
    %42 = vector.shape_cast %39 : vector<16x128xf32> to vector<2x8x128xf32>
    %cst_26 = arith.constant dense<0.000000e+00> : vector<2x128xf32>
    %43 = vector.multi_reduction <add>, %42, %cst_26 [1] : vector<2x8x128xf32> to vector<2x128xf32>
    %44 = vector.shape_cast %43 : vector<2x128xf32> to vector<2x1x128xf32>
    %cst_27 = arith.constant 8.000000e+00 : f32
    %45 = vector.broadcast %cst_27 : f32 to vector<2x1x128xf32>
    %46 = arith.divf %44, %45 : vector<2x1x128xf32>
    %47 = vector.broadcast %46 : vector<2x1x128xf32> to vector<2x8x128xf32>
    %48 = arith.subf %42, %47 : vector<2x8x128xf32>
    %49 = arith.mulf %48, %48 : vector<2x8x128xf32>
    %cst_28 = arith.constant dense<0.000000e+00> : vector<2x128xf32>
    %50 = vector.multi_reduction <add>, %49, %cst_28 [1] : vector<2x8x128xf32> to vector<2x128xf32>
    %51 = vector.shape_cast %50 : vector<2x128xf32> to vector<2x1x128xf32>
    %cst_29 = arith.constant 8.000000e+00 : f32
    %52 = vector.broadcast %cst_29 : f32 to vector<2x1x128xf32>
    %53 = arith.divf %51, %52 : vector<2x1x128xf32>
    %54 = vector.broadcast %46 : vector<2x1x128xf32> to vector<2x8x128xf32>
    %55 = arith.subf %42, %54 : vector<2x8x128xf32>
    %cst_30 = arith.constant 9.99999974E-6 : f32
    %56 = vector.broadcast %cst_30 : f32 to vector<2x1x128xf32>
    %57 = arith.addf %53, %56 : vector<2x1x128xf32>
    %58 = math.rsqrt %57 : vector<2x1x128xf32>
    %59 = vector.broadcast %58 : vector<2x1x128xf32> to vector<2x8x128xf32>
    %60 = arith.mulf %55, %59 : vector<2x8x128xf32>
    %61 = vector.shape_cast %40 : vector<1x128xf32> to vector<1x1x128xf32>
    %62 = vector.broadcast %61 : vector<1x1x128xf32> to vector<2x8x128xf32>
    %63 = arith.mulf %60, %62 : vector<2x8x128xf32>
    %64 = vector.shape_cast %41 : vector<1x128xf32> to vector<1x1x128xf32>
    %65 = vector.broadcast %64 : vector<1x1x128xf32> to vector<2x8x128xf32>
    %66 = arith.addf %63, %65 : vector<2x8x128xf32>
    %67 = vector.shape_cast %66 : vector<2x8x128xf32> to vector<16x128xf32>
    %cst_31 = arith.constant 0.000000e+00 : f32
    %68 = vector.broadcast %cst_31 : f32 to vector<16x128xf32>
    %69 = arith.maximumf %67, %68 : vector<16x128xf32>
    %c0_32 = arith.constant 0 : index
    %c0_33 = arith.constant 0 : index
    %70 = vector.load %arg9[%c0_32, %c0_33] : memref<128x128xf32, #tpu.memory_space<vmem>>, vector<128x128xf32>
    %cst_34 = arith.constant dense<0.000000e+00> : vector<16x128xf32>
    %71 = tpu.matmul %69, %70, %cst_34 {dimension_numbers = #tpu.dot_dimension_numbers<[1], [0], [0], [1], [0, 0, 1, 1], [], []>} : vector<16x128xf32>, vector<128x128xf32>, vector<16x128xf32> -> vector<16x128xf32>
    %72 = vector.shape_cast %71 : vector<16x128xf32> to vector<2x8x128xf32>
    %cst_35 = arith.constant dense<0.000000e+00> : vector<2x128xf32>
    %73 = vector.multi_reduction <add>, %72, %cst_35 [1] : vector<2x8x128xf32> to vector<2x128xf32>
    %74 = vector.shape_cast %73 : vector<2x128xf32> to vector<2x1x128xf32>
    %cst_36 = arith.constant 8.000000e+00 : f32
    %75 = vector.broadcast %cst_36 : f32 to vector<2x1x128xf32>
    %76 = arith.divf %74, %75 : vector<2x1x128xf32>
    %77 = vector.broadcast %76 : vector<2x1x128xf32> to vector<2x8x128xf32>
    %78 = arith.subf %72, %77 : vector<2x8x128xf32>
    %79 = arith.mulf %78, %78 : vector<2x8x128xf32>
    %cst_37 = arith.constant dense<0.000000e+00> : vector<2x128xf32>
    %80 = vector.multi_reduction <add>, %79, %cst_37 [1] : vector<2x8x128xf32> to vector<2x128xf32>
    %81 = vector.shape_cast %80 : vector<2x128xf32> to vector<2x1x128xf32>
    %cst_38 = arith.constant 8.000000e+00 : f32
    %82 = vector.broadcast %cst_38 : f32 to vector<2x1x128xf32>
    %83 = arith.divf %81, %82 : vector<2x1x128xf32>
    %84 = vector.broadcast %76 : vector<2x1x128xf32> to vector<2x8x128xf32>
    %85 = arith.subf %72, %84 : vector<2x8x128xf32>
    %cst_39 = arith.constant 9.99999974E-6 : f32
    %86 = vector.broadcast %cst_39 : f32 to vector<2x1x128xf32>
    %87 = arith.addf %83, %86 : vector<2x1x128xf32>
    %88 = math.rsqrt %87 : vector<2x1x128xf32>
    %89 = vector.broadcast %88 : vector<2x1x128xf32> to vector<2x8x128xf32>
    %90 = arith.mulf %85, %89 : vector<2x8x128xf32>
    %91 = vector.extract_strided_slice %90 {offsets = [0, 0, 0], sizes = [1, 8, 128], strides = [1, 1, 1]} : vector<2x8x128xf32> to vector<1x8x128xf32>
    %92 = vector.shape_cast %91 : vector<1x8x128xf32> to vector<8x128xf32>
    %93 = vector.extract_strided_slice %90 {offsets = [1, 0, 0], sizes = [1, 8, 128], strides = [1, 1, 1]} : vector<2x8x128xf32> to vector<1x8x128xf32>
    %94 = vector.shape_cast %93 : vector<1x8x128xf32> to vector<8x128xf32>
    %cst_40 = arith.constant dense<0.000000e+00> : vector<128x128xf32>
    %95 = tpu.matmul %92, %94, %cst_40 {dimension_numbers = #tpu.dot_dimension_numbers<[0], [0], [1], [1], [0, 1, 1, 1], [], []>} : vector<8x128xf32>, vector<8x128xf32>, vector<128x128xf32> -> vector<128x128xf32>
    %cst_41 = arith.constant 1.250000e-01 : f32
    %96 = vector.broadcast %cst_41 : f32 to vector<128x128xf32>
    %97 = arith.mulf %95, %96 : vector<128x128xf32>
    %98 = tpu.iota {dimensions = array<i32: 0>} : vector<128x128xi32>
    %99 = tpu.iota {dimensions = array<i32: 1>} : vector<128x128xi32>
    %100 = arith.cmpi eq, %98, %99 : vector<128x128xi32>
    %101 = arith.mulf %97, %97 : vector<128x128xf32>
    %102 = vector.shape_cast %101 : vector<128x128xf32> to vector<1x128x128xf32>
    %cst_42 = arith.constant dense<0.000000e+00> : vector<1xf32>
    %103 = vector.multi_reduction <add>, %102, %cst_42 [1, 2] : vector<1x128x128xf32> to vector<1xf32>
    %104 = vector.shape_cast %103 : vector<1xf32> to vector<1x1x1xf32>
    %105 = vector.extract %104[0, 0, 0] : f32 from vector<1x1x1xf32>
    %cst_43 = arith.constant 0.994899988 : f32
    %106 = vector.broadcast %cst_43 : f32 to vector<128x128xf32>
    %107 = arith.mulf %106, %101 : vector<128x128xf32>
    %cst_44 = arith.constant 2.000000e+00 : f32
    %108 = vector.broadcast %cst_44 : f32 to vector<128x128xf32>
    %109 = arith.mulf %108, %97 : vector<128x128xf32>
    %110 = arith.subf %107, %109 : vector<128x128xf32>
    %cst_45 = arith.constant 0.000000e+00 : f32
    %111 = vector.broadcast %cst_45 : f32 to vector<128x128xf32>
    %112 = arith.select %100, %110, %111 : vector<128x128xi1>, vector<128x128xf32>
    %113 = vector.shape_cast %112 : vector<128x128xf32> to vector<1x128x128xf32>
    %cst_46 = arith.constant dense<0.000000e+00> : vector<1xf32>
    %114 = vector.multi_reduction <add>, %113, %cst_46 [1, 2] : vector<1x128x128xf32> to vector<1xf32>
    %115 = vector.shape_cast %114 : vector<1xf32> to vector<1x1x1xf32>
    %116 = vector.extract %115[0, 0, 0] : f32 from vector<1x1x1xf32>
    %cst_47 = arith.constant 1.280000e+02 : f32
    %117 = arith.addf %116, %cst_47 : f32
    %cst_48 = arith.constant 5.100000e-03 : f32
    %118 = arith.mulf %cst_48, %105 : f32
    %119 = arith.addf %117, %118 : f32
    %c0_49 = arith.constant 0 : index
    %c0_50 = arith.constant 0 : index
    %120 = memref.load %arg11[%c0_49, %c0_50] : memref<1x1xf32, #tpu.memory_space<smem>>
    memref.store %119, %arg11[%c0_49, %c0_50] : memref<1x1xf32, #tpu.memory_space<smem>>
    return
  }
  func.func @transform_0(%arg0: i32) -> (i32, i32) {
    %c0_i32 = arith.constant 0 : i32
    %c0_i32_0 = arith.constant 0 : i32
    %c0_i32_1 = arith.constant 0 : i32
    return %c0_i32, %c0_i32_0 : i32, i32
  }
  func.func @transform_1(%arg0: i32) -> (i32, i32) {
    %c0_i32 = arith.constant 0 : i32
    %c0_i32_0 = arith.constant 0 : i32
    %c0_i32_1 = arith.constant 0 : i32
    return %c0_i32, %c0_i32_0 : i32, i32
  }
  func.func @transform_2(%arg0: i32) -> (i32, i32) {
    %c0_i32 = arith.constant 0 : i32
    %c0_i32_0 = arith.constant 0 : i32
    %c0_i32_1 = arith.constant 0 : i32
    return %c0_i32, %c0_i32_0 : i32, i32
  }
  func.func @transform_3(%arg0: i32) -> (i32, i32) {
    %c0_i32 = arith.constant 0 : i32
    %c0_i32_0 = arith.constant 0 : i32
    %c0_i32_1 = arith.constant 0 : i32
    return %c0_i32, %c0_i32_0 : i32, i32
  }
  func.func @transform_4(%arg0: i32) -> (i32, i32) {
    %c0_i32 = arith.constant 0 : i32
    %c0_i32_0 = arith.constant 0 : i32
    %c0_i32_1 = arith.constant 0 : i32
    return %c0_i32, %c0_i32_0 : i32, i32
  }
  func.func @transform_5(%arg0: i32) -> (i32, i32) {
    %c0_i32 = arith.constant 0 : i32
    %c0_i32_0 = arith.constant 0 : i32
    %c0_i32_1 = arith.constant 0 : i32
    return %c0_i32, %c0_i32_0 : i32, i32
  }
  func.func @transform_6(%arg0: i32) -> (i32, i32) {
    %c0_i32 = arith.constant 0 : i32
    %c0_i32_0 = arith.constant 0 : i32
    %c0_i32_1 = arith.constant 0 : i32
    return %c0_i32, %c0_i32_0 : i32, i32
  }
  func.func @transform_7(%arg0: i32) -> (i32, i32) {
    %c0_i32 = arith.constant 0 : i32
    %c0_i32_0 = arith.constant 0 : i32
    %c0_i32_1 = arith.constant 0 : i32
    return %c0_i32, %c0_i32_0 : i32, i32
  }
  func.func @transform_8(%arg0: i32) -> (i32, i32) {
    %c0_i32 = arith.constant 0 : i32
    %c0_i32_0 = arith.constant 0 : i32
    %c0_i32_1 = arith.constant 0 : i32
    return %c0_i32, %c0_i32_0 : i32, i32
  }
  func.func @transform_9(%arg0: i32) -> (i32, i32) {
    %c0_i32 = arith.constant 0 : i32
    %c0_i32_0 = arith.constant 0 : i32
    %c0_i32_1 = arith.constant 0 : i32
    return %c0_i32, %c0_i32_0 : i32, i32
  }
  func.func @transform_10(%arg0: i32) -> (i32, i32) {
    %c0_i32 = arith.constant 0 : i32
    %c0_i32_0 = arith.constant 0 : i32
    %c0_i32_1 = arith.constant 0 : i32
    return %c0_i32, %c0_i32_0 : i32, i32
  }
}

</mosaic_0001>

<llo_original>
// kernel: tpu_custom_call.1
$region0: #{tpu_custom_call.1}
  #allocation0 [shape = 'u32[]', space=smem, size = 0x4, offset = 0x4, fixed_abs, tag = 'smem constant byte address 0x4 - core index']
  #allocation1 [shape = 'u32[72,128]{1,0:T(1,128)}', space=vmem, size = 0x9000, scoped, tag = 'internal scratch']
  %s0 = inlined_call_operand.hbm [shape: f32[16,1024], index: 0, kind: input, shape index: {}]
  %s1 = inlined_call_operand.hbm [shape: f32[1024,128], index: 1, kind: input, shape index: {}]
  %s2 = inlined_call_operand.hbm [shape: f32[128,128], index: 2, kind: input, shape index: {}]
  %s3 = inlined_call_operand.vmem [shape: f32[1,128], index: 3, kind: input, shape index: {}]
  %s4 = inlined_call_operand.vmem [shape: f32[1,128], index: 4, kind: input, shape index: {}]
  %s5 = inlined_call_operand.hbm [shape: f32[128,128], index: 5, kind: input, shape index: {}]
  %s6 = inlined_call_operand.vmem [shape: f32[1,128], index: 6, kind: input, shape index: {}]
  %s7 = inlined_call_operand.vmem [shape: f32[1,128], index: 7, kind: input, shape index: {}]
  %s8 = inlined_call_operand.hbm [shape: f32[128,128], index: 8, kind: input, shape index: {}]
  %s9 = inlined_call_operand.hbm [shape: f32[16,128], index: 9, kind: output, shape index: {0}]
  %s10 = inlined_call_operand.hbm [shape: f32[1,1], index: 10, kind: output, shape index: {1}]
  %11 = xla_tuple %s9, %s10
  %s12 = sld [smem:[#allocation0]]
  $region74: #{tpu_custom_call.1} parent=0
    _
  %s14 = ssub.s32 1, %s12
  %s15 = scalar_select 0, %s14, %s12
  $region1: #{tpu_custom_call.1} parent=0
    #allocation2 [shape = 'u8[65536]{0}', space=vmem, size = 0x10000, scoped, tag = 'input window, operand 0, single buffered']
    #allocation3 [shape = 's32[1]{0}', space=sflag, size = 0x4, scoped, tag = 'scoped memory for tpu_custom_call.1']
    #allocation4 [shape = 's32[1]{0}', space=sflag, size = 0x4, scoped, tag = 'scoped memory for tpu_custom_call.1']
    #allocation5 [shape = 's32[1]{0}', space=sflag, size = 0x4, scoped, tag = 'scoped memory for tpu_custom_call.1']
    #allocation6 [shape = 'u8[524288]{0}', space=vmem, size = 0x80000, scoped, tag = 'input window, operand 1, single buffered']
    #allocation7 [shape = 's32[1]{0}', space=sflag, size = 0x4, scoped, tag = 'scoped memory for tpu_custom_call.1']
    #allocation8 [shape = 'u8[65536]{0}', space=vmem, size = 0x10000, scoped, tag = 'input window, operand 2, single buffered']
    #allocation9 [shape = 'u8[65536]{0}', space=vmem, size = 0x10000, scoped, tag = 'input window, operand 5, single buffered']
    #allocation10 [shape = 's32[1]{0}', space=sflag, size = 0x4, scoped, tag = 'scoped memory for tpu_custom_call.1']
    #allocation11 [shape = 'u8[65536]{0}', space=vmem, size = 0x10000, scoped, tag = 'input window, operand 8, single buffered']
    #allocation12 [shape = 'u8[8192]{0}', space=vmem, size = 0x2000, scoped, tag = 'output window, operand 0, single buffered']
    #allocation13 [shape = 'u8[512]{0}', space=smem, size = 0x200, scoped, tag = 'output window, operand 1, single buffered']
    %16 = vsyncpa [#allocation3], 0
    %17 = vsyncpa [#allocation7], 0
    %18 = vsyncpa [#allocation10], 0
    %19 = vsyncpa [#allocation4], 0
    %20 = vsyncpa [#allocation5], 0
    // Predicated region
    $region2: #{tpu_custom_call.1} parent=1 // pred_check
      _
    $region3: #{tpu_custom_call.1} parent=1 // pred_check_branch
      %22 = sbr.rel (0) target = $region5
    $region4: #{tpu_custom_call.1} parent=1 // pred_region
      %24 = vsyncadd [#allocation3], 0
      %s25 = sshll.u32 %s0, 4
      %s26 = int_to_ptr.hbm [resolvable:$true] %s25
      %s27 = sshll.u32 [#allocation2], 4
      %s28 = int_to_ptr.vmem [resolvable:$true] %s27
      %33 = dma.hbm_to_vmem [thread:$0]  %s26, 2048, %s28, [#allocation3], 1024, 1024, 64
    $region5: #{tpu_custom_call.1} parent=1 // pred_fallthru
      _
    // Predicated region
    $region6: #{tpu_custom_call.1} parent=1 // pred_check
      _
    $region7: #{tpu_custom_call.1} parent=1 // pred_check_branch
      %35 = sbr.rel (0) target = $region9
    $region8: #{tpu_custom_call.1} parent=1 // pred_region
      %37 = vsyncadd [#allocation7], 0
      %s38 = sshll.u32 %s1, 4
      %s39 = int_to_ptr.hbm [resolvable:$true] %s38
      %s40 = sshll.u32 [#allocation6], 4
      %s41 = int_to_ptr.vmem [resolvable:$true] %s40
      %46 = dma.hbm_to_vmem [thread:$0]  %s39, 16384, %s41, [#allocation7], 128, 128, 8
    $region9: #{tpu_custom_call.1} parent=1 // pred_fallthru
      _
    // Predicated region
    $region10: #{tpu_custom_call.1} parent=1 // pred_check
      _
    $region11: #{tpu_custom_call.1} parent=1 // pred_check_branch
      %48 = sbr.rel (0) target = $region13
    $region12: #{tpu_custom_call.1} parent=1 // pred_region
      %50 = vsyncadd [#allocation7], 0
      %s51 = sshll.u32 %s2, 4
      %s52 = int_to_ptr.hbm [resolvable:$true] %s51
      %s53 = sshll.u32 [#allocation8], 4
      %s54 = int_to_ptr.vmem [resolvable:$true] %s53
      %59 = dma.hbm_to_vmem [thread:$0]  %s52, 2048, %s54, [#allocation7], 128, 128, 8
    $region13: #{tpu_custom_call.1} parent=1 // pred_fallthru
      _
    // Predicated region
    $region14: #{tpu_custom_call.1} parent=1 // pred_check
      _
    $region15: #{tpu_custom_call.1} parent=1 // pred_check_branch
      %61 = sbr.rel (0) target = $region17
    $region16: #{tpu_custom_call.1} parent=1 // pred_region
      _
    $region17: #{tpu_custom_call.1} parent=1 // pred_fallthru
      _
    // Predicated region
    $region18: #{tpu_custom_call.1} parent=1 // pred_check
      _
    $region19: #{tpu_custom_call.1} parent=1 // pred_check_branch
      %63 = sbr.rel (0) target = $region21
    $region20: #{tpu_custom_call.1} parent=1 // pred_region
      _
    $region21: #{tpu_custom_call.1} parent=1 // pred_fallthru
      _
    // Predicated region
    $region22: #{tpu_custom_call.1} parent=1 // pred_check
      _
    $region23: #{tpu_custom_call.1} parent=1 // pred_check_branch
      %65 = sbr.rel (0) target = $region25
    $region24: #{tpu_custom_call.1} parent=1 // pred_region
      %67 = vsyncadd [#allocation10], 0
      %s68 = sshll.u32 %s5, 4
      %s69 = int_to_ptr.hbm [resolvable:$true] %s68
      %s70 = sshll.u32 [#allocation9], 4
      %s71 = int_to_ptr.vmem [resolvable:$true] %s70
      %76 = dma.hbm_to_vmem [thread:$0]  %s69, 2048, %s71, [#allocation10], 128, 128, 8
    $region25: #{tpu_custom_call.1} parent=1 // pred_fallthru
      _
    // Predicated region
    $region26: #{tpu_custom_call.1} parent=1 // pred_check
      _
    $region27: #{tpu_custom_call.1} parent=1 // pred_check_branch
      %78 = sbr.rel (0) target = $region29
    $region28: #{tpu_custom_call.1} parent=1 // pred_region
      _
    $region29: #{tpu_custom_call.1} parent=1 // pred_fallthru
      _
    // Predicated region
    $region30: #{tpu_custom_call.1} parent=1 // pred_check
      _
    $region31: #{tpu_custom_call.1} parent=1 // pred_check_branch
      %80 = sbr.rel (0) target = $region33
    $region32: #{tpu_custom_call.1} parent=1 // pred_region
      _
    $region33: #{tpu_custom_call.1} parent=1 // pred_fallthru
      _
    // Predicated region
    $region34: #{tpu_custom_call.1} parent=1 // pred_check
      _
    $region35: #{tpu_custom_call.1} parent=1 // pred_check_branch
      %82 = sbr.rel (0) target = $region37
    $region36: #{tpu_custom_call.1} parent=1 // pred_region
      %84 = vsyncadd [#allocation10], 0
      %s85 = sshll.u32 %s8, 4
      %s86 = int_to_ptr.hbm [resolvable:$true] %s85
      %s87 = sshll.u32 [#allocation11], 4
      %s88 = int_to_ptr.vmem [resolvable:$true] %s87
      %93 = dma.hbm_to_vmem [thread:$0]  %s86, 2048, %s88, [#allocation10], 128, 128, 8
    $region37: #{tpu_custom_call.1} parent=1 // pred_fallthru
      _
    // Predicated region
    $region38: #{tpu_custom_call.1} parent=1 // pred_check
      _
    $region39: #{tpu_custom_call.1} parent=1 // pred_check_branch
      %95 = sbr.rel (0) target = $region41
    $region40: #{tpu_custom_call.1} parent=1 // pred_region
      %97 = dma.done [#allocation3], 2048
    $region41: #{tpu_custom_call.1} parent=1 // pred_fallthru
      _
    // Predicated region
    $region42: #{tpu_custom_call.1} parent=1 // pred_check
      _
    $region43: #{tpu_custom_call.1} parent=1 // pred_check_branch
      %99 = sbr.rel (0) target = $region45
    $region44: #{tpu_custom_call.1} parent=1 // pred_region
      %101 = dma.done [#allocation7], 16384
    $region45: #{tpu_custom_call.1} parent=1 // pred_fallthru
      _
    // Predicated region
    $region46: #{tpu_custom_call.1} parent=1 // pred_check
      _
    $region47: #{tpu_custom_call.1} parent=1 // pred_check_branch
      %103 = sbr.rel (0) target = $region49
    $region48: #{tpu_custom_call.1} parent=1 // pred_region
      %105 = dma.done [#allocation7], 2048
    $region49: #{tpu_custom_call.1} parent=1 // pred_fallthru
      _
    // Predicated region
    $region50: #{tpu_custom_call.1} parent=1 // pred_check
      _
    $region51: #{tpu_custom_call.1} parent=1 // pred_check_branch
      %107 = sbr.rel (0) target = $region53
    $region52: #{tpu_custom_call.1} parent=1 // pred_region
      %109 = dma.done [#allocation10], 2048
    $region53: #{tpu_custom_call.1} parent=1 // pred_fallthru
      _
    // Predicated region
    $region54: #{tpu_custom_call.1} parent=1 // pred_check
      _
    $region55: #{tpu_custom_call.1} parent=1 // pred_check_branch
      %111 = sbr.rel (0) target = $region57
    $region56: #{tpu_custom_call.1} parent=1 // pred_region
      %113 = dma.done [#allocation10], 2048
    $region57: #{tpu_custom_call.1} parent=1 // pred_fallthru
      _
    %v114 = vld [vmem:[#allocation2] sm:$0xff]
    %v115 = vld [vmem:[#allocation2 + $0x8] sm:$0xff]
    %v116 = vld [vmem:[#allocation2 + $0x10] sm:$0xff]
    %v117 = vld [vmem:[#allocation2 + $0x18] sm:$0xff]
    %v118 = vld [vmem:[#allocation2 + $0x20] sm:$0xff]
    %v119 = vld [vmem:[#allocation2 + $0x28] sm:$0xff]
    %v120 = vld [vmem:[#allocation2 + $0x30] sm:$0xff]
    %v121 = vld [vmem:[#allocation2 + $0x38] sm:$0xff]
    %v122 = vld [vmem:[#allocation2 + $0x40] sm:$0xff]
    %v123 = vld [vmem:[#allocation2 + $0x48] sm:$0xff]
    %v124 = vld [vmem:[#allocation2 + $0x50] sm:$0xff]
    %v125 = vld [vmem:[#allocation2 + $0x58] sm:$0xff]
    %v126 = vld [vmem:[#allocation2 + $0x60] sm:$0xff]
    %v127 = vld [vmem:[#allocation2 + $0x68] sm:$0xff]
    %v128 = vld [vmem:[#allocation2 + $0x70] sm:$0xff]
    %v129 = vld [vmem:[#allocation2 + $0x78] sm:$0xff]
    %v130 = vld [vmem:[#allocation6] sm:$0xff]
    %v131 = vld [vmem:[#allocation6 + $0x8] sm:$0xff]
    %v132 = vld [vmem:[#allocation6 + $0x10] sm:$0xff]
    %v133 = vld [vmem:[#allocation6 + $0x18] sm:$0xff]
    %v134 = vld [vmem:[#allocation6 + $0x20] sm:$0xff]
    %v135 = vld [vmem:[#allocation6 + $0x28] sm:$0xff]
    %v136 = vld [vmem:[#allocation6 + $0x30] sm:$0xff]
    %v137 = vld [vmem:[#allocation6 + $0x38] sm:$0xff]
    %v138 = vld [vmem:[#allocation6 + $0x40] sm:$0xff]
    %v139 = vld [vmem:[#allocation6 + $0x48] sm:$0xff]
    %v140 = vld [vmem:[#allocation6 + $0x50] sm:$0xff]
    %v141 = vld [vmem:[#allocation6 + $0x58] sm:$0xff]
    %v142 = vld [vmem:[#allocation6 + $0x60] sm:$0xff]
    %v143 = vld [vmem:[#allocation6 + $0x68] sm:$0xff]
    %v144 = vld [vmem:[#allocation6 + $0x70] sm:$0xff]
    %v145 = vld [vmem:[#allocation6 + $0x78] sm:$0xff]
    %v146 = vld [vmem:[#allocation6 + $0x80] sm:$0xff]
    %v147 = vld [vmem:[#allocation6 + $0x88] sm:$0xff]
    %v148 = vld [vmem:[#allocation6 + $0x90] sm:$0xff]
    %v149 = vld [vmem:[#allocation6 + $0x98] sm:$0xff]
    %v150 = vld [vmem:[#allocation6 + $0xa0] sm:$0xff]
    %v151 = vld [vmem:[#allocation6 + $0xa8] sm:$0xff]
    %v152 = vld [vmem:[#allocation6 + $0xb0] sm:$0xff]
    %v153 = vld [vmem:[#allocation6 + $0xb8] sm:$0xff]
    %v154 = vld [vmem:[#allocation6 + $0xc0] sm:$0xff]
    %v155 = vld [vmem:[#allocation6 + $0xc8] sm:$0xff]
    %v156 = vld [vmem:[#allocation6 + $0xd0] sm:$0xff]
    %v157 = vld [vmem:[#allocation6 + $0xd8] sm:$0xff]
    %v158 = vld [vmem:[#allocation6 + $0xe0] sm:$0xff]
    %v159 = vld [vmem:[#allocation6 + $0xe8] sm:$0xff]
    %v160 = vld [vmem:[#allocation6 + $0xf0] sm:$0xff]
    %v161 = vld [vmem:[#allocation6 + $0xf8] sm:$0xff]
    %v162 = vld [vmem:[#allocation6 + $0x100] sm:$0xff]
    %v163 = vld [vmem:[#allocation6 + $0x108] sm:$0xff]
    %v164 = vld [vmem:[#allocation6 + $0x110] sm:$0xff]
    %v165 = vld [vmem:[#allocation6 + $0x118] sm:$0xff]
    %v166 = vld [vmem:[#allocation6 + $0x120] sm:$0xff]
    %v167 = vld [vmem:[#allocation6 + $0x128] sm:$0xff]
    %v168 = vld [vmem:[#allocation6 + $0x130] sm:$0xff]
    %v169 = vld [vmem:[#allocation6 + $0x138] sm:$0xff]
    %v170 = vld [vmem:[#allocation6 + $0x140] sm:$0xff]
    %v171 = vld [vmem:[#allocation6 + $0x148] sm:$0xff]
    %v172 = vld [vmem:[#allocation6 + $0x150] sm:$0xff]
    %v173 = vld [vmem:[#allocation6 + $0x158] sm:$0xff]
    %v174 = vld [vmem:[#allocation6 + $0x160] sm:$0xff]
    %v175 = vld [vmem:[#allocation6 + $0x168] sm:$0xff]
    %v176 = vld [vmem:[#allocation6 + $0x170] sm:$0xff]
    %v177 = vld [vmem:[#allocation6 + $0x178] sm:$0xff]
    %v178 = vld [vmem:[#allocation6 + $0x180] sm:$0xff]
    %v179 = vld [vmem:[#allocation6 + $0x188] sm:$0xff]
    %v180 = vld [vmem:[#allocation6 + $0x190] sm:$0xff]
    %v181 = vld [vmem:[#allocation6 + $0x198] sm:$0xff]
    %v182 = vld [vmem:[#allocation6 + $0x1a0] sm:$0xff]
    %v183 = vld [vmem:[#allocation6 + $0x1a8] sm:$0xff]
    %v184 = vld [vmem:[#allocation6 + $0x1b0] sm:$0xff]
    %v185 = vld [vmem:[#allocation6 + $0x1b8] sm:$0xff]
    %v186 = vld [vmem:[#allocation6 + $0x1c0] sm:$0xff]
    %v187 = vld [vmem:[#allocation6 + $0x1c8] sm:$0xff]
    %v188 = vld [vmem:[#allocation6 + $0x1d0] sm:$0xff]
    %v189 = vld [vmem:[#allocation6 + $0x1d8] sm:$0xff]
    %v190 = vld [vmem:[#allocation6 + $0x1e0] sm:$0xff]
    %v191 = vld [vmem:[#allocation6 + $0x1e8] sm:$0xff]
    %v192 = vld [vmem:[#allocation6 + $0x1f0] sm:$0xff]
    %v193 = vld [vmem:[#allocation6 + $0x1f8] sm:$0xff]
    %v194 = vld [vmem:[#allocation6 + $0x200] sm:$0xff]
    %v195 = vld [vmem:[#allocation6 + $0x208] sm:$0xff]
    %v196 = vld [vmem:[#allocation6 + $0x210] sm:$0xff]
    %v197 = vld [vmem:[#allocation6 + $0x218] sm:$0xff]
    %v198 = vld [vmem:[#allocation6 + $0x220] sm:$0xff]
    %v199 = vld [vmem:[#allocation6 + $0x228] sm:$0xff]
    %v200 = vld [vmem:[#allocation6 + $0x230] sm:$0xff]
    %v201 = vld [vmem:[#allocation6 + $0x238] sm:$0xff]
    %v202 = vld [vmem:[#allocation6 + $0x240] sm:$0xff]
    %v203 = vld [vmem:[#allocation6 + $0x248] sm:$0xff]
    %v204 = vld [vmem:[#allocation6 + $0x250] sm:$0xff]
    %v205 = vld [vmem:[#allocation6 + $0x258] sm:$0xff]
    %v206 = vld [vmem:[#allocation6 + $0x260] sm:$0xff]
    %v207 = vld [vmem:[#allocation6 + $0x268] sm:$0xff]
    %v208 = vld [vmem:[#allocation6 + $0x270] sm:$0xff]
    %v209 = vld [vmem:[#allocation6 + $0x278] sm:$0xff]
    %v210 = vld [vmem:[#allocation6 + $0x280] sm:$0xff]
    %v211 = vld [vmem:[#allocation6 + $0x288] sm:$0xff]
    %v212 = vld [vmem:[#allocation6 + $0x290] sm:$0xff]
    %v213 = vld [vmem:[#allocation6 + $0x298] sm:$0xff]
    %v214 = vld [vmem:[#allocation6 + $0x2a0] sm:$0xff]
    %v215 = vld [vmem:[#allocation6 + $0x2a8] sm:$0xff]
    %v216 = vld [vmem:[#allocation6 + $0x2b0] sm:$0xff]
    %v217 = vld [vmem:[#allocation6 + $0x2b8] sm:$0xff]
    %v218 = vld [vmem:[#allocation6 + $0x2c0] sm:$0xff]
    %v219 = vld [vmem:[#allocation6 + $0x2c8] sm:$0xff]
    %v220 = vld [vmem:[#allocation6 + $0x2d0] sm:$0xff]
    %v221 = vld [vmem:[#allocation6 + $0x2d8] sm:$0xff]
    %v222 = vld [vmem:[#allocation6 + $0x2e0] sm:$0xff]
    %v223 = vld [vmem:[#allocation6 + $0x2e8] sm:$0xff]
    %v224 = vld [vmem:[#allocation6 + $0x2f0] sm:$0xff]
    %v225 = vld [vmem:[#allocation6 + $0x2f8] sm:$0xff]
    %v226 = vld [vmem:[#allocation6 + $0x300] sm:$0xff]
    %v227 = vld [vmem:[#allocation6 + $0x308] sm:$0xff]
    %v228 = vld [vmem:[#allocation6 + $0x310] sm:$0xff]
    %v229 = vld [vmem:[#allocation6 + $0x318] sm:$0xff]
    %v230 = vld [vmem:[#allocation6 + $0x320] sm:$0xff]
    %v231 = vld [vmem:[#allocation6 + $0x328] sm:$0xff]
    %v232 = vld [vmem:[#allocation6 + $0x330] sm:$0xff]
    %v233 = vld [vmem:[#allocation6 + $0x338] sm:$0xff]
    %v234 = vld [vmem:[#allocation6 + $0x340] sm:$0xff]
    %v235 = vld [vmem:[#allocation6 + $0x348] sm:$0xff]
    %v236 = vld [vmem:[#allocation6 + $0x350] sm:$0xff]
    %v237 = vld [vmem:[#allocation6 + $0x358] sm:$0xff]
    %v238 = vld [vmem:[#allocation6 + $0x360] sm:$0xff]
    %v239 = vld [vmem:[#allocation6 + $0x368] sm:$0xff]
    %v240 = vld [vmem:[#allocation6 + $0x370] sm:$0xff]
    %v241 = vld [vmem:[#allocation6 + $0x378] sm:$0xff]
    %v242 = vld [vmem:[#allocation6 + $0x380] sm:$0xff]
    %v243 = vld [vmem:[#allocation6 + $0x388] sm:$0xff]
    %v244 = vld [vmem:[#allocation6 + $0x390] sm:$0xff]
    %v245 = vld [vmem:[#allocation6 + $0x398] sm:$0xff]
    %v246 = vld [vmem:[#allocation6 + $0x3a0] sm:$0xff]
    %v247 = vld [vmem:[#allocation6 + $0x3a8] sm:$0xff]
    %v248 = vld [vmem:[#allocation6 + $0x3b0] sm:$0xff]
    %v249 = vld [vmem:[#allocation6 + $0x3b8] sm:$0xff]
    %v250 = vld [vmem:[#allocation6 + $0x3c0] sm:$0xff]
    %v251 = vld [vmem:[#allocation6 + $0x3c8] sm:$0xff]
    %v252 = vld [vmem:[#allocation6 + $0x3d0] sm:$0xff]
    %v253 = vld [vmem:[#allocation6 + $0x3d8] sm:$0xff]
    %v254 = vld [vmem:[#allocation6 + $0x3e0] sm:$0xff]
    %v255 = vld [vmem:[#allocation6 + $0x3e8] sm:$0xff]
    %v256 = vld [vmem:[#allocation6 + $0x3f0] sm:$0xff]
    %v257 = vld [vmem:[#allocation6 + $0x3f8] sm:$0xff]
    %258 = vmatpush.msra.mxu0 %v145
    %259 = vmatpush.msra.mxu0 %v144
    %260 = vmatpush.msra.mxu0 %v143
    %261 = vmatpush.msra.mxu0 %v142
    %262 = vmatpush.msra.mxu0 %v141
    %263 = vmatpush.msra.mxu0 %v140
    %264 = vmatpush.msra.mxu0 %v139
    %265 = vmatpush.msra.mxu0 %v138
    %266 = vmatpush.msra.mxu0 %v137
    %267 = vmatpush.msra.mxu0 %v136
    %268 = vmatpush.msra.mxu0 %v135
    %269 = vmatpush.msra.mxu0 %v134
    %270 = vmatpush.msra.mxu0 %v133
    %271 = vmatpush.msra.mxu0 %v132
    %272 = vmatpush.msra.mxu0 %v131
    %273 = vmatpush.msra.mxu0 %v130
    %274 = vmatmul.f32.gmra.mxu0 %v114
    %v275 = vpop.f32.mrf.mxu0
    %v276 = vadd.f32 0.0, %v275
    %277 = vmatmul.f32.gmra.mxu0 %v122
    %v278 = vpop.f32.mrf.mxu0
    %v279 = vadd.f32 0.0, %v278
    %280 = vdwg.mxu0
    %281 = vmatpush.msra.mxu0 %v161
    %282 = vmatpush.msra.mxu0 %v160
    %283 = vmatpush.msra.mxu0 %v159
    %284 = vmatpush.msra.mxu0 %v158
    %285 = vmatpush.msra.mxu0 %v157
    %286 = vmatpush.msra.mxu0 %v156
    %287 = vmatpush.msra.mxu0 %v155
    %288 = vmatpush.msra.mxu0 %v154
    %289 = vmatpush.msra.mxu0 %v153
    %290 = vmatpush.msra.mxu0 %v152
    %291 = vmatpush.msra.mxu0 %v151
    %292 = vmatpush.msra.mxu0 %v150
    %293 = vmatpush.msra.mxu0 %v149
    %294 = vmatpush.msra.mxu0 %v148
    %295 = vmatpush.msra.mxu0 %v147
    %296 = vmatpush.msra.mxu0 %v146
    %297 = vmatmul.f32.gmra.mxu0 %v115
    %v298 = vpop.f32.mrf.mxu0
    %v299 = vadd.f32 %v276, %v298
    %300 = vmatmul.f32.gmra.mxu0 %v123
    %v301 = vpop.f32.mrf.mxu0
    %v302 = vadd.f32 %v279, %v301
    %303 = vdwg.mxu0
    %304 = vmatpush.msra.mxu0 %v177
    %305 = vmatpush.msra.mxu0 %v176
    %306 = vmatpush.msra.mxu0 %v175
    %307 = vmatpush.msra.mxu0 %v174
    %308 = vmatpush.msra.mxu0 %v173
    %309 = vmatpush.msra.mxu0 %v172
    %310 = vmatpush.msra.mxu0 %v171
    %311 = vmatpush.msra.mxu0 %v170
    %312 = vmatpush.msra.mxu0 %v169
    %313 = vmatpush.msra.mxu0 %v168
    %314 = vmatpush.msra.mxu0 %v167
    %315 = vmatpush.msra.mxu0 %v166
    %316 = vmatpush.msra.mxu0 %v165
    %317 = vmatpush.msra.mxu0 %v164
    %318 = vmatpush.msra.mxu0 %v163
    %319 = vmatpush.msra.mxu0 %v162
    %320 = vmatmul.f32.gmra.mxu0 %v116
    %v321 = vpop.f32.mrf.mxu0
    %v322 = vadd.f32 %v299, %v321
    %323 = vmatmul.f32.gmra.mxu0 %v124
    %v324 = vpop.f32.mrf.mxu0
    %v325 = vadd.f32 %v302, %v324
    %326 = vdwg.mxu0
    %327 = vmatpush.msra.mxu0 %v193
    %328 = vmatpush.msra.mxu0 %v192
    %329 = vmatpush.msra.mxu0 %v191
    %330 = vmatpush.msra.mxu0 %v190
    %331 = vmatpush.msra.mxu0 %v189
    %332 = vmatpush.msra.mxu0 %v188
    %333 = vmatpush.msra.mxu0 %v187
    %334 = vmatpush.msra.mxu0 %v186
    %335 = vmatpush.msra.mxu0 %v185
    %336 = vmatpush.msra.mxu0 %v184
    %337 = vmatpush.msra.mxu0 %v183
    %338 = vmatpush.msra.mxu0 %v182
    %339 = vmatpush.msra.mxu0 %v181
    %340 = vmatpush.msra.mxu0 %v180
    %341 = vmatpush.msra.mxu0 %v179
    %342 = vmatpush.msra.mxu0 %v178
    %343 = vmatmul.f32.gmra.mxu0 %v117
    %v344 = vpop.f32.mrf.mxu0
    %v345 = vadd.f32 %v322, %v344
    %346 = vmatmul.f32.gmra.mxu0 %v125
    %v347 = vpop.f32.mrf.mxu0
    %v348 = vadd.f32 %v325, %v347
    %349 = vdwg.mxu0
    %350 = vmatpush.msra.mxu0 %v209
    %351 = vmatpush.msra.mxu0 %v208
    %352 = vmatpush.msra.mxu0 %v207
    %353 = vmatpush.msra.mxu0 %v206
    %354 = vmatpush.msra.mxu0 %v205
    %355 = vmatpush.msra.mxu0 %v204
    %356 = vmatpush.msra.mxu0 %v203
    %357 = vmatpush.msra.mxu0 %v202
    %358 = vmatpush.msra.mxu0 %v201
    %359 = vmatpush.msra.mxu0 %v200
    %360 = vmatpush.msra.mxu0 %v199
    %361 = vmatpush.msra.mxu0 %v198
    %362 = vmatpush.msra.mxu0 %v197
    %363 = vmatpush.msra.mxu0 %v196
    %364 = vmatpush.msra.mxu0 %v195
    %365 = vmatpush.msra.mxu0 %v194
    %366 = vmatmul.f32.gmra.mxu0 %v118
    %v367 = vpop.f32.mrf.mxu0
    %v368 = vadd.f32 %v345, %v367
    %369 = vmatmul.f32.gmra.mxu0 %v126
    %v370 = vpop.f32.mrf.mxu0
    %v371 = vadd.f32 %v348, %v370
    %372 = vdwg.mxu0
    %373 = vmatpush.msra.mxu0 %v225
    %374 = vmatpush.msra.mxu0 %v224
    %375 = vmatpush.msra.mxu0 %v223
    %376 = vmatpush.msra.mxu0 %v222
    %377 = vmatpush.msra.mxu0 %v221
    %378 = vmatpush.msra.mxu0 %v220
    %379 = vmatpush.msra.mxu0 %v219
    %380 = vmatpush.msra.mxu0 %v218
    %381 = vmatpush.msra.mxu0 %v217
    %382 = vmatpush.msra.mxu0 %v216
    %383 = vmatpush.msra.mxu0 %v215
    %384 = vmatpush.msra.mxu0 %v214
    %385 = vmatpush.msra.mxu0 %v213
    %386 = vmatpush.msra.mxu0 %v212
    %387 = vmatpush.msra.mxu0 %v211
    %388 = vmatpush.msra.mxu0 %v210
    %389 = vmatmul.f32.gmra.mxu0 %v119
    %v390 = vpop.f32.mrf.mxu0
    %v391 = vadd.f32 %v368, %v390
    %392 = vmatmul.f32.gmra.mxu0 %v127
    %v393 = vpop.f32.mrf.mxu0
    %v394 = vadd.f32 %v371, %v393
    %395 = vdwg.mxu0
    %396 = vmatpush.msra.mxu0 %v241
    %397 = vmatpush.msra.mxu0 %v240
    %398 = vmatpush.msra.mxu0 %v239
    %399 = vmatpush.msra.mxu0 %v238
    %400 = vmatpush.msra.mxu0 %v237
    %401 = vmatpush.msra.mxu0 %v236
    %402 = vmatpush.msra.mxu0 %v235
    %403 = vmatpush.msra.mxu0 %v234
    %404 = vmatpush.msra.mxu0 %v233
    %405 = vmatpush.msra.mxu0 %v232
    %406 = vmatpush.msra.mxu0 %v231
    %407 = vmatpush.msra.mxu0 %v230
    %408 = vmatpush.msra.mxu0 %v229
    %409 = vmatpush.msra.mxu0 %v228
    %410 = vmatpush.msra.mxu0 %v227
    %411 = vmatpush.msra.mxu0 %v226
    %412 = vmatmul.f32.gmra.mxu0 %v120
    %v413 = vpop.f32.mrf.mxu0
    %v414 = vadd.f32 %v391, %v413
    %415 = vmatmul.f32.gmra.mxu0 %v128
    %v416 = vpop.f32.mrf.mxu0
    %v417 = vadd.f32 %v394, %v416
    %418 = vdwg.mxu0
    %419 = vmatpush.msra.mxu0 %v257
    %420 = vmatpush.msra.mxu0 %v256
    %421 = vmatpush.msra.mxu0 %v255
    %422 = vmatpush.msra.mxu0 %v254
    %423 = vmatpush.msra.mxu0 %v253
    %424 = vmatpush.msra.mxu0 %v252
    %425 = vmatpush.msra.mxu0 %v251
    %426 = vmatpush.msra.mxu0 %v250
    %427 = vmatpush.msra.mxu0 %v249
    %428 = vmatpush.msra.mxu0 %v248
    %429 = vmatpush.msra.mxu0 %v247
    %430 = vmatpush.msra.mxu0 %v246
    %431 = vmatpush.msra.mxu0 %v245
    %432 = vmatpush.msra.mxu0 %v244
    %433 = vmatpush.msra.mxu0 %v243
    %434 = vmatpush.msra.mxu0 %v242
    %435 = vmatmul.f32.gmra.mxu0 %v121
    %v436 = vpop.f32.mrf.mxu0
    %v437 = vadd.f32 %v414, %v436
    %438 = vmatmul.f32.gmra.mxu0 %v129
    %v439 = vpop.f32.mrf.mxu0
    %v440 = vadd.f32 %v417, %v439
    %441 = vdwg.mxu0
    %v442 = vmax.f32 %v437, 0.0
    %v443 = vmax.f32 %v440, 0.0
    %444 = vst [vmem:[#allocation12] sm:$0xff] %v442
    %445 = vst [vmem:[#allocation12 + $0x8] sm:$0xff] %v443
    %v446 = vld [vmem:[#allocation8] sm:$0xff]
    %v447 = vld [vmem:[#allocation8 + $0x8] sm:$0xff]
    %v448 = vld [vmem:[#allocation8 + $0x10] sm:$0xff]
    %v449 = vld [vmem:[#allocation8 + $0x18] sm:$0xff]
    %v450 = vld [vmem:[#allocation8 + $0x20] sm:$0xff]
    %v451 = vld [vmem:[#allocation8 + $0x28] sm:$0xff]
    %v452 = vld [vmem:[#allocation8 + $0x30] sm:$0xff]
    %v453 = vld [vmem:[#allocation8 + $0x38] sm:$0xff]
    %v454 = vld [vmem:[#allocation8 + $0x40] sm:$0xff]
    %v455 = vld [vmem:[#allocation8 + $0x48] sm:$0xff]
    %v456 = vld [vmem:[#allocation8 + $0x50] sm:$0xff]
    %v457 = vld [vmem:[#allocation8 + $0x58] sm:$0xff]
    %v458 = vld [vmem:[#allocation8 + $0x60] sm:$0xff]
    %v459 = vld [vmem:[#allocation8 + $0x68] sm:$0xff]
    %v460 = vld [vmem:[#allocation8 + $0x70] sm:$0xff]
    %v461 = vld [vmem:[#allocation8 + $0x78] sm:$0xff]
    %462 = vmatpush.msra.mxu0 %v461
    %463 = vmatpush.msra.mxu0 %v460
    %464 = vmatpush.msra.mxu0 %v459
    %465 = vmatpush.msra.mxu0 %v458
    %466 = vmatpush.msra.mxu0 %v457
    %467 = vmatpush.msra.mxu0 %v456
    %468 = vmatpush.msra.mxu0 %v455
    %469 = vmatpush.msra.mxu0 %v454
    %470 = vmatpush.msra.mxu0 %v453
    %471 = vmatpush.msra.mxu0 %v452
    %472 = vmatpush.msra.mxu0 %v451
    %473 = vmatpush.msra.mxu0 %v450
    %474 = vmatpush.msra.mxu0 %v449
    %475 = vmatpush.msra.mxu0 %v448
    %476 = vmatpush.msra.mxu0 %v447
    %477 = vmatpush.msra.mxu0 %v446
    %478 = vmatmul.f32.gmra.mxu0 %v442
    %v479 = vpop.f32.mrf.mxu0
    %v480 = vadd.f32 0.0, %v479
    %481 = vmatmul.f32.gmra.mxu0 %v443
    %v482 = vpop.f32.mrf.mxu0
    %v483 = vadd.f32 0.0, %v482
    %484 = vdwg.mxu0
    %v485 = vld [vmem:[%s3] sm:$0x1]
    %v486 = vld [vmem:[%s4] sm:$0x1]
    %v487 = vrot.slane %v480, 4
    %v488 = vadd.f32 %v480, %v487
    %v489 = vrot.slane %v488, 2
    %v490 = vadd.f32 %v488, %v489
    %v491 = vrot.slane %v490, 1
    %v492 = vadd.f32 %v490, %v491
    %v493 = vrot.slane %v483, 4
    %v494 = vadd.f32 %v483, %v493
    %v495 = vrot.slane %v494, 2
    %v496 = vadd.f32 %v494, %v495
    %v497 = vrot.slane %v496, 1
    %v498 = vadd.f32 %v496, %v497
    %v499 = vrcp.pop 8.0
    %v500 = vmul.f32 8.0, %v499
    %v501 = vsub.f32 1.0, %v500
    %v502 = vmul.f32 %v499, %v501
    %v503 = vadd.f32 %v499, %v502
    %vm504 = vweird.f32 %v499
    %v505 = vsel %vm504, %v499, %v503
    %v506 = vmul.f32 %v492, %v505
    %v507 = vmul.f32 %v498, %v505
    %v508 = vsub.f32 %v480, %v506
    %v509 = vsub.f32 %v483, %v507
    %v510 = vmul.f32 %v508, %v508
    %v511 = vmul.f32 %v509, %v509
    %v512 = vrot.slane %v510, 4
    %v513 = vadd.f32 %v510, %v512
    %v514 = vrot.slane %v513, 2
    %v515 = vadd.f32 %v513, %v514
    %v516 = vrot.slane %v515, 1
    %v517 = vadd.f32 %v515, %v516
    %v518 = vrot.slane %v511, 4
    %v519 = vadd.f32 %v511, %v518
    %v520 = vrot.slane %v519, 2
    %v521 = vadd.f32 %v519, %v520
    %v522 = vrot.slane %v521, 1
    %v523 = vadd.f32 %v521, %v522
    %v524 = vmul.f32 %v517, %v505
    %v525 = vmul.f32 %v523, %v505
    %v526 = vadd.f32 %v524, 1e-05
    %v527 = vadd.f32 %v525, 1e-05
    %v528 = vrsqrt.pop %v526
    %v529 = vmul.f32 %v528, %v526
    %v530 = vmul.f32 %v529, %v528
    %v531 = vmul.f32 0.5, %v530
    %v532 = vsub.f32 1.5, %v531
    %v533 = vmul.f32 %v528, %v532
    %vm534 = vweird.f32 %v526
    %vm535 = vweird.f32 %v528
    %vm536 = vmor %vm534, %vm535
    %v537 = vsel %vm536, %v528, %v533
    %v538 = vrsqrt.pop %v527
    %v539 = vmul.f32 %v538, %v527
    %v540 = vmul.f32 %v539, %v538
    %v541 = vmul.f32 0.5, %v540
    %v542 = vsub.f32 1.5, %v541
    %v543 = vmul.f32 %v538, %v542
    %vm544 = vweird.f32 %v527
    %vm545 = vweird.f32 %v538
    %vm546 = vmor %vm544, %vm545
    %v547 = vsel %vm546, %v538, %v543
    %v548 = vmul.f32 %v508, %v537
    %v549 = vmul.f32 %v509, %v547
    %v551 = vperm.slane %v485, 0
    %v553 = vmul.f32 %v548, %v551
    %v554 = vmul.f32 %v549, %v551
    %v556 = vperm.slane %v486, 0
    %v558 = vadd.f32 %v553, %v556
    %v559 = vadd.f32 %v554, %v556
    %v560 = vmax.f32 %v558, 0.0
    %v561 = vmax.f32 %v559, 0.0
    %v562 = vld [vmem:[#allocation9] sm:$0xff]
    %v563 = vld [vmem:[#allocation9 + $0x8] sm:$0xff]
    %v564 = vld [vmem:[#allocation9 + $0x10] sm:$0xff]
    %v565 = vld [vmem:[#allocation9 + $0x18] sm:$0xff]
    %v566 = vld [vmem:[#allocation9 + $0x20] sm:$0xff]
    %v567 = vld [vmem:[#allocation9 + $0x28] sm:$0xff]
    %v568 = vld [vmem:[#allocation9 + $0x30] sm:$0xff]
    %v569 = vld [vmem:[#allocation9 + $0x38] sm:$0xff]
    %v570 = vld [vmem:[#allocation9 + $0x40] sm:$0xff]
    %v571 = vld [vmem:[#allocation9 + $0x48] sm:$0xff]
    %v572 = vld [vmem:[#allocation9 + $0x50] sm:$0xff]
    %v573 = vld [vmem:[#allocation9 + $0x58] sm:$0xff]
    %v574 = vld [vmem:[#allocation9 + $0x60] sm:$0xff]
    %v575 = vld [vmem:[#allocation9 + $0x68] sm:$0xff]
    %v576 = vld [vmem:[#allocation9 + $0x70] sm:$0xff]
    %v577 = vld [vmem:[#allocation9 + $0x78] sm:$0xff]
    %578 = vmatpush.msra.mxu0 %v577
    %579 = vmatpush.msra.mxu0 %v576
    %580 = vmatpush.msra.mxu0 %v575
    %581 = vmatpush.msra.mxu0 %v574
    %582 = vmatpush.msra.mxu0 %v573
    %583 = vmatpush.msra.mxu0 %v572
    %584 = vmatpush.msra.mxu0 %v571
    %585 = vmatpush.msra.mxu0 %v570
    %586 = vmatpush.msra.mxu0 %v569
    %587 = vmatpush.msra.mxu0 %v568
    %588 = vmatpush.msra.mxu0 %v567
    %589 = vmatpush.msra.mxu0 %v566
    %590 = vmatpush.msra.mxu0 %v565
    %591 = vmatpush.msra.mxu0 %v564
    %592 = vmatpush.msra.mxu0 %v563
    %593 = vmatpush.msra.mxu0 %v562
    %594 = vmatmul.f32.gmra.mxu0 %v560
    %v595 = vpop.f32.mrf.mxu0
    %v596 = vadd.f32 0.0, %v595
    %597 = vmatmul.f32.gmra.mxu0 %v561
    %v598 = vpop.f32.mrf.mxu0
    %v599 = vadd.f32 0.0, %v598
    %600 = vdwg.mxu0
    %v601 = vld [vmem:[%s6] sm:$0x1]
    %v602 = vld [vmem:[%s7] sm:$0x1]
    %v603 = vrot.slane %v596, 4
    %v604 = vadd.f32 %v596, %v603
    %v605 = vrot.slane %v604, 2
    %v606 = vadd.f32 %v604, %v605
    %v607 = vrot.slane %v606, 1
    %v608 = vadd.f32 %v606, %v607
    %v609 = vrot.slane %v599, 4
    %v610 = vadd.f32 %v599, %v609
    %v611 = vrot.slane %v610, 2
    %v612 = vadd.f32 %v610, %v611
    %v613 = vrot.slane %v612, 1
    %v614 = vadd.f32 %v612, %v613
    %v615 = vmul.f32 %v608, %v505
    %v616 = vmul.f32 %v614, %v505
    %v617 = vsub.f32 %v596, %v615
    %v618 = vsub.f32 %v599, %v616
    %v619 = vmul.f32 %v617, %v617
    %v620 = vmul.f32 %v618, %v618
    %v621 = vrot.slane %v619, 4
    %v622 = vadd.f32 %v619, %v621
    %v623 = vrot.slane %v622, 2
    %v624 = vadd.f32 %v622, %v623
    %v625 = vrot.slane %v624, 1
    %v626 = vadd.f32 %v624, %v625
    %v627 = vrot.slane %v620, 4
    %v628 = vadd.f32 %v620, %v627
    %v629 = vrot.slane %v628, 2
    %v630 = vadd.f32 %v628, %v629
    %v631 = vrot.slane %v630, 1
    %v632 = vadd.f32 %v630, %v631
    %v633 = vmul.f32 %v626, %v505
    %v634 = vmul.f32 %v632, %v505
    %v635 = vadd.f32 %v633, 1e-05
    %v636 = vadd.f32 %v634, 1e-05
    %v637 = vrsqrt.pop %v635
    %v638 = vmul.f32 %v637, %v635
    %v639 = vmul.f32 %v638, %v637
    %v640 = vmul.f32 0.5, %v639
    %v641 = vsub.f32 1.5, %v640
    %v642 = vmul.f32 %v637, %v641
    %vm643 = vweird.f32 %v635
    %vm644 = vweird.f32 %v637
    %vm645 = vmor %vm643, %vm644
    %v646 = vsel %vm645, %v637, %v642
    %v647 = vrsqrt.pop %v636
    %v648 = vmul.f32 %v647, %v636
    %v649 = vmul.f32 %v648, %v647
    %v650 = vmul.f32 0.5, %v649
    %v651 = vsub.f32 1.5, %v650
    %v652 = vmul.f32 %v647, %v651
    %vm653 = vweird.f32 %v636
    %vm654 = vweird.f32 %v647
    %vm655 = vmor %vm653, %vm654
    %v656 = vsel %vm655, %v647, %v652
    %v657 = vmul.f32 %v617, %v646
    %v658 = vmul.f32 %v618, %v656
    %v660 = vperm.slane %v601, 0
    %v662 = vmul.f32 %v657, %v660
    %v663 = vmul.f32 %v658, %v660
    %v665 = vperm.slane %v602, 0
    %v667 = vadd.f32 %v662, %v665
    %v668 = vadd.f32 %v663, %v665
    %v669 = vmax.f32 %v667, 0.0
    %v670 = vmax.f32 %v668, 0.0
    %v671 = vld [vmem:[#allocation11] sm:$0xff]
    %v672 = vld [vmem:[#allocation11 + $0x8] sm:$0xff]
    %v673 = vld [vmem:[#allocation11 + $0x10] sm:$0xff]
    %v674 = vld [vmem:[#allocation11 + $0x18] sm:$0xff]
    %v675 = vld [vmem:[#allocation11 + $0x20] sm:$0xff]
    %v676 = vld [vmem:[#allocation11 + $0x28] sm:$0xff]
    %v677 = vld [vmem:[#allocation11 + $0x30] sm:$0xff]
    %v678 = vld [vmem:[#allocation11 + $0x38] sm:$0xff]
    %v679 = vld [vmem:[#allocation11 + $0x40] sm:$0xff]
    %v680 = vld [vmem:[#allocation11 + $0x48] sm:$0xff]
    %v681 = vld [vmem:[#allocation11 + $0x50] sm:$0xff]
    %v682 = vld [vmem:[#allocation11 + $0x58] sm:$0xff]
    %v683 = vld [vmem:[#allocation11 + $0x60] sm:$0xff]
    %v684 = vld [vmem:[#allocation11 + $0x68] sm:$0xff]
    %v685 = vld [vmem:[#allocation11 + $0x70] sm:$0xff]
    %v686 = vld [vmem:[#allocation11 + $0x78] sm:$0xff]
    %687 = vmatpush.msra.mxu0 %v686
    %688 = vmatpush.msra.mxu0 %v685
    %689 = vmatpush.msra.mxu0 %v684
    %690 = vmatpush.msra.mxu0 %v683
    %691 = vmatpush.msra.mxu0 %v682
    %692 = vmatpush.msra.mxu0 %v681
    %693 = vmatpush.msra.mxu0 %v680
    %694 = vmatpush.msra.mxu0 %v679
    %695 = vmatpush.msra.mxu0 %v678
    %696 = vmatpush.msra.mxu0 %v677
    %697 = vmatpush.msra.mxu0 %v676
    %698 = vmatpush.msra.mxu0 %v675
    %699 = vmatpush.msra.mxu0 %v674
    %700 = vmatpush.msra.mxu0 %v673
    %701 = vmatpush.msra.mxu0 %v672
    %702 = vmatpush.msra.mxu0 %v671
    %703 = vmatmul.f32.gmra.mxu0 %v669
    %v704 = vpop.f32.mrf.mxu0
    %v705 = vadd.f32 0.0, %v704
    %706 = vmatmul.f32.gmra.mxu0 %v670
    %v707 = vpop.f32.mrf.mxu0
    %v708 = vadd.f32 0.0, %v707
    %709 = vdwg.mxu0
    %v710 = vrot.slane %v705, 4
    %v711 = vadd.f32 %v705, %v710
    %v712 = vrot.slane %v711, 2
    %v713 = vadd.f32 %v711, %v712
    %v714 = vrot.slane %v713, 1
    %v715 = vadd.f32 %v713, %v714
    %v716 = vrot.slane %v708, 4
    %v717 = vadd.f32 %v708, %v716
    %v718 = vrot.slane %v717, 2
    %v719 = vadd.f32 %v717, %v718
    %v720 = vrot.slane %v719, 1
    %v721 = vadd.f32 %v719, %v720
    %v722 = vmul.f32 %v715, %v505
    %v723 = vmul.f32 %v721, %v505
    %v724 = vsub.f32 %v705, %v722
    %v725 = vsub.f32 %v708, %v723
    %v726 = vmul.f32 %v724, %v724
    %v727 = vmul.f32 %v725, %v725
    %v728 = vrot.slane %v726, 4
    %v729 = vadd.f32 %v726, %v728
    %v730 = vrot.slane %v729, 2
    %v731 = vadd.f32 %v729, %v730
    %v732 = vrot.slane %v731, 1
    %v733 = vadd.f32 %v731, %v732
    %v734 = vrot.slane %v727, 4
    %v735 = vadd.f32 %v727, %v734
    %v736 = vrot.slane %v735, 2
    %v737 = vadd.f32 %v735, %v736
    %v738 = vrot.slane %v737, 1
    %v739 = vadd.f32 %v737, %v738
    %v740 = vmul.f32 %v733, %v505
    %v741 = vmul.f32 %v739, %v505
    %v742 = vadd.f32 %v740, 1e-05
    %v743 = vadd.f32 %v741, 1e-05
    %v744 = vrsqrt.pop %v742
    %v745 = vmul.f32 %v744, %v742
    %v746 = vmul.f32 %v745, %v744
    %v747 = vmul.f32 0.5, %v746
    %v748 = vsub.f32 1.5, %v747
    %v749 = vmul.f32 %v744, %v748
    %vm750 = vweird.f32 %v742
    %vm751 = vweird.f32 %v744
    %vm752 = vmor %vm750, %vm751
    %v753 = vsel %vm752, %v744, %v749
    %v754 = vrsqrt.pop %v743
    %v755 = vmul.f32 %v754, %v743
    %v756 = vmul.f32 %v755, %v754
    %v757 = vmul.f32 0.5, %v756
    %v758 = vsub.f32 1.5, %v757
    %v759 = vmul.f32 %v754, %v758
    %vm760 = vweird.f32 %v743
    %vm761 = vweird.f32 %v754
    %vm762 = vmor %vm760, %vm761
    %v763 = vsel %vm762, %v754, %v759
    %v764 = vmul.f32 %v724, %v753
    %v765 = vmul.f32 %v725, %v763
    %766 = vxpose.xlu0.b32.start [1/16] %v764, 128
    %767 = vxpose.xlu0.b32.cont [2/16] 0.0, 128
    %768 = vxpose.xlu0.b32.cont [3/16] 0.0, 128
    %769 = vxpose.xlu0.b32.cont [4/16] 0.0, 128
    %770 = vxpose.xlu0.b32.cont [5/16] 0.0, 128
    %771 = vxpose.xlu0.b32.cont [6/16] 0.0, 128
    %772 = vxpose.xlu0.b32.cont [7/16] 0.0, 128
    %773 = vxpose.xlu0.b32.cont [8/16] 0.0, 128
    %774 = vxpose.xlu0.b32.cont [9/16] 0.0, 128
    %775 = vxpose.xlu0.b32.cont [10/16] 0.0, 128
    %776 = vxpose.xlu0.b32.cont [11/16] 0.0, 128
    %777 = vxpose.xlu0.b32.cont [12/16] 0.0, 128
    %778 = vxpose.xlu0.b32.cont [13/16] 0.0, 128
    %779 = vxpose.xlu0.b32.cont [14/16] 0.0, 128
    %780 = vxpose.xlu0.b32.cont [15/16] 0.0, 128
    %781 = vxpose.xlu0.b32.end [16/16] 0.0, 128
    %v782 = vpop.trf.xlu0
    %v783 = vpop.trf.xlu0
    %v784 = vpop.trf.xlu0
    %v785 = vpop.trf.xlu0
    %v786 = vpop.trf.xlu0
    %v787 = vpop.trf.xlu0
    %v788 = vpop.trf.xlu0
    %v789 = vpop.trf.xlu0
    %v790 = vpop.trf.xlu0
    %v791 = vpop.trf.xlu0
    %v792 = vpop.trf.xlu0
    %v793 = vpop.trf.xlu0
    %v794 = vpop.trf.xlu0
    %v795 = vpop.trf.xlu0
    %v796 = vpop.trf.xlu0
    %v797 = vpop.trf.xlu0
    %vm798 = vcmask 64512
    %v800 = vsel %vm798, %v782, 0
    %v803 = vsel %vm798, %v783, 0
    %v806 = vsel %vm798, %v784, 0
    %v809 = vsel %vm798, %v785, 0
    %v812 = vsel %vm798, %v786, 0
    %v815 = vsel %vm798, %v787, 0
    %v818 = vsel %vm798, %v788, 0
    %v821 = vsel %vm798, %v789, 0
    %v824 = vsel %vm798, %v790, 0
    %v827 = vsel %vm798, %v791, 0
    %v830 = vsel %vm798, %v792, 0
    %v833 = vsel %vm798, %v793, 0
    %v836 = vsel %vm798, %v794, 0
    %v839 = vsel %vm798, %v795, 0
    %v842 = vsel %vm798, %v796, 0
    %v845 = vsel %vm798, %v797, 0
    %847 = vmatpush.msra.mxu0 0.0
    %848 = vmatpush.msra.mxu0 0.0
    %849 = vmatpush.msra.mxu0 0.0
    %850 = vmatpush.msra.mxu0 0.0
    %851 = vmatpush.msra.mxu0 0.0
    %852 = vmatpush.msra.mxu0 0.0
    %853 = vmatpush.msra.mxu0 0.0
    %854 = vmatpush.msra.mxu0 0.0
    %855 = vmatpush.msra.mxu0 0.0
    %856 = vmatpush.msra.mxu0 0.0
    %857 = vmatpush.msra.mxu0 0.0
    %858 = vmatpush.msra.mxu0 0.0
    %859 = vmatpush.msra.mxu0 0.0
    %860 = vmatpush.msra.mxu0 0.0
    %861 = vmatpush.msra.mxu0 0.0
    %862 = vmatpush.msra.mxu0 %v765
    %863 = vmatmul.f32.gmra.mxu0 %v800
    %v864 = vpop.f32.mrf.mxu0
    %v865 = vadd.f32 0.0, %v864
    %866 = vmatmul.f32.gmra.mxu0 %v803
    %v867 = vpop.f32.mrf.mxu0
    %v868 = vadd.f32 0.0, %v867
    %869 = vmatmul.f32.gmra.mxu0 %v806
    %v870 = vpop.f32.mrf.mxu0
    %v871 = vadd.f32 0.0, %v870
    %872 = vmatmul.f32.gmra.mxu0 %v809
    %v873 = vpop.f32.mrf.mxu0
    %v874 = vadd.f32 0.0, %v873
    %875 = vmatmul.f32.gmra.mxu0 %v812
    %v876 = vpop.f32.mrf.mxu0
    %v877 = vadd.f32 0.0, %v876
    %878 = vmatmul.f32.gmra.mxu0 %v815
    %v879 = vpop.f32.mrf.mxu0
    %v880 = vadd.f32 0.0, %v879
    %881 = vmatmul.f32.gmra.mxu0 %v818
    %v882 = vpop.f32.mrf.mxu0
    %v883 = vadd.f32 0.0, %v882
    %884 = vmatmul.f32.gmra.mxu0 %v821
    %v885 = vpop.f32.mrf.mxu0
    %v886 = vadd.f32 0.0, %v885
    %887 = vmatmul.f32.gmra.mxu0 %v824
    %v888 = vpop.f32.mrf.mxu0
    %v889 = vadd.f32 0.0, %v888
    %890 = vmatmul.f32.gmra.mxu0 %v827
    %v891 = vpop.f32.mrf.mxu0
    %v892 = vadd.f32 0.0, %v891
    %893 = vmatmul.f32.gmra.mxu0 %v830
    %v894 = vpop.f32.mrf.mxu0
    %v895 = vadd.f32 0.0, %v894
    %896 = vmatmul.f32.gmra.mxu0 %v833
    %v897 = vpop.f32.mrf.mxu0
    %v898 = vadd.f32 0.0, %v897
    %899 = vmatmul.f32.gmra.mxu0 %v836
    %v900 = vpop.f32.mrf.mxu0
    %v901 = vadd.f32 0.0, %v900
    %902 = vmatmul.f32.gmra.mxu0 %v839
    %v903 = vpop.f32.mrf.mxu0
    %v904 = vadd.f32 0.0, %v903
    %905 = vmatmul.f32.gmra.mxu0 %v842
    %v906 = vpop.f32.mrf.mxu0
    %v907 = vadd.f32 0.0, %v906
    %908 = vmatmul.f32.gmra.mxu0 %v845
    %v909 = vpop.f32.mrf.mxu0
    %v910 = vadd.f32 0.0, %v909
    %911 = vdwg.mxu0
    %v912 = vmul.f32 %v865, 0.125
    %v913 = vmul.f32 %v868, 0.125
    %v914 = vmul.f32 %v871, 0.125
    %v915 = vmul.f32 %v874, 0.125
    %v916 = vmul.f32 %v877, 0.125
    %v917 = vmul.f32 %v880, 0.125
    %v918 = vmul.f32 %v883, 0.125
    %v919 = vmul.f32 %v886, 0.125
    %v920 = vmul.f32 %v889, 0.125
    %v921 = vmul.f32 %v892, 0.125
    %v922 = vmul.f32 %v895, 0.125
    %v923 = vmul.f32 %v898, 0.125
    %v924 = vmul.f32 %v901, 0.125
    %v925 = vmul.f32 %v904, 0.125
    %v926 = vmul.f32 %v907, 0.125
    %v927 = vmul.f32 %v910, 0.125
    %v928 = vlaneseq
    %v929 = vshrl.u32 %v928, 7
    %v930 = vadd.s32 %v929, 8
    %v931 = vadd.s32 %v929, 16
    %v932 = vadd.s32 %v929, 24
    %v933 = vadd.s32 %v929, 32
    %v934 = vadd.s32 %v929, 40
    %v935 = vadd.s32 %v929, 48
    %v936 = vadd.s32 %v929, 56
    %v937 = vadd.s32 %v929, 64
    %v938 = vadd.s32 %v929, 72
    %v939 = vadd.s32 %v929, 80
    %v940 = vadd.s32 %v929, 88
    %v941 = vadd.s32 %v929, 96
    %v942 = vadd.s32 %v929, 104
    %v943 = vadd.s32 %v929, 112
    %v944 = vadd.s32 %v929, 120
    %v945 = vlaneseq
    %v946 = vand.u32 %v945, 127
    %vm947 = vcmp.eq.s32.totalorder %v929, %v946
    %vm948 = vcmp.eq.s32.totalorder %v930, %v946
    %vm949 = vcmp.eq.s32.totalorder %v931, %v946
    %vm950 = vcmp.eq.s32.totalorder %v932, %v946
    %vm951 = vcmp.eq.s32.totalorder %v933, %v946
    %vm952 = vcmp.eq.s32.totalorder %v934, %v946
    %vm953 = vcmp.eq.s32.totalorder %v935, %v946
    %vm954 = vcmp.eq.s32.totalorder %v936, %v946
    %vm955 = vcmp.eq.s32.totalorder %v937, %v946
    %vm956 = vcmp.eq.s32.totalorder %v938, %v946
    %vm957 = vcmp.eq.s32.totalorder %v939, %v946
    %vm958 = vcmp.eq.s32.totalorder %v940, %v946
    %vm959 = vcmp.eq.s32.totalorder %v941, %v946
    %vm960 = vcmp.eq.s32.totalorder %v942, %v946
    %vm961 = vcmp.eq.s32.totalorder %v943, %v946
    %vm962 = vcmp.eq.s32.totalorder %v944, %v946
    %v963 = vmul.f32 %v912, %v912
    %v964 = vmul.f32 %v913, %v913
    %v965 = vmul.f32 %v914, %v914
    %v966 = vmul.f32 %v915, %v915
    %v967 = vmul.f32 %v916, %v916
    %v968 = vmul.f32 %v917, %v917
    %v969 = vmul.f32 %v918, %v918
    %v970 = vmul.f32 %v919, %v919
    %v971 = vmul.f32 %v920, %v920
    %v972 = vmul.f32 %v921, %v921
    %v973 = vmul.f32 %v922, %v922
    %v974 = vmul.f32 %v923, %v923
    %v975 = vmul.f32 %v924, %v924
    %v976 = vmul.f32 %v925, %v925
    %v977 = vmul.f32 %v926, %v926
    %v978 = vmul.f32 %v927, %v927
    %v979 = vadd.f32 %v963, %v964
    %v980 = vadd.f32 %v979, %v965
    %v981 = vadd.f32 %v980, %v966
    %v982 = vadd.f32 %v981, %v967
    %v983 = vadd.f32 %v982, %v968
    %v984 = vadd.f32 %v983, %v969
    %v985 = vadd.f32 %v984, %v970
    %v986 = vadd.f32 %v985, %v971
    %v987 = vadd.f32 %v986, %v972
    %v988 = vadd.f32 %v987, %v973
    %v989 = vadd.f32 %v988, %v974
    %v990 = vadd.f32 %v989, %v975
    %v991 = vadd.f32 %v990, %v976
    %v992 = vadd.f32 %v991, %v977
    %v993 = vadd.f32 %v992, %v978
    %994 = vadd.xlane.f32.xlu0 %v993
    %v995 = vpop.xlane.xlu0 %994
    %v996 = vrot.slane %v995, 4
    %v997 = vadd.f32 %v995, %v996
    %v998 = vrot.slane %v997, 2
    %v999 = vadd.f32 %v997, %v998
    %v1000 = vrot.slane %v999, 1
    %v1001 = vadd.f32 %v999, %v1000
    %s1002 = vtos %v1001
    %v1003 = vmul.f32 %v963, 0.9949
    %v1004 = vmul.f32 %v964, 0.9949
    %v1005 = vmul.f32 %v965, 0.9949
    %v1006 = vmul.f32 %v966, 0.9949
    %v1007 = vmul.f32 %v967, 0.9949
    %v1008 = vmul.f32 %v968, 0.9949
    %v1009 = vmul.f32 %v969, 0.9949
    %v1010 = vmul.f32 %v970, 0.9949
    %v1011 = vmul.f32 %v971, 0.9949
    %v1012 = vmul.f32 %v972, 0.9949
    %v1013 = vmul.f32 %v973, 0.9949
    %v1014 = vmul.f32 %v974, 0.9949
    %v1015 = vmul.f32 %v975, 0.9949
    %v1016 = vmul.f32 %v976, 0.9949
    %v1017 = vmul.f32 %v977, 0.9949
    %v1018 = vmul.f32 %v978, 0.9949
    %v1019 = vmul.f32 %v912, 2.0
    %v1020 = vmul.f32 %v913, 2.0
    %v1021 = vmul.f32 %v914, 2.0
    %v1022 = vmul.f32 %v915, 2.0
    %v1023 = vmul.f32 %v916, 2.0
    %v1024 = vmul.f32 %v917, 2.0
    %v1025 = vmul.f32 %v918, 2.0
    %v1026 = vmul.f32 %v919, 2.0
    %v1027 = vmul.f32 %v920, 2.0
    %v1028 = vmul.f32 %v921, 2.0
    %v1029 = vmul.f32 %v922, 2.0
    %v1030 = vmul.f32 %v923, 2.0
    %v1031 = vmul.f32 %v924, 2.0
    %v1032 = vmul.f32 %v925, 2.0
    %v1033 = vmul.f32 %v926, 2.0
    %v1034 = vmul.f32 %v927, 2.0
    %v1035 = vsub.f32 %v1003, %v1019
    %v1036 = vsub.f32 %v1004, %v1020
    %v1037 = vsub.f32 %v1005, %v1021
    %v1038 = vsub.f32 %v1006, %v1022
    %v1039 = vsub.f32 %v1007, %v1023
    %v1040 = vsub.f32 %v1008, %v1024
    %v1041 = vsub.f32 %v1009, %v1025
    %v1042 = vsub.f32 %v1010, %v1026
    %v1043 = vsub.f32 %v1011, %v1027
    %v1044 = vsub.f32 %v1012, %v1028
    %v1045 = vsub.f32 %v1013, %v1029
    %v1046 = vsub.f32 %v1014, %v1030
    %v1047 = vsub.f32 %v1015, %v1031
    %v1048 = vsub.f32 %v1016, %v1032
    %v1049 = vsub.f32 %v1017, %v1033
    %v1050 = vsub.f32 %v1018, %v1034
    %v1051 = vsel %vm947, %v1035, 0.0
    %v1052 = vsel %vm948, %v1036, 0.0
    %v1053 = vsel %vm949, %v1037, 0.0
    %v1054 = vsel %vm950, %v1038, 0.0
    %v1055 = vsel %vm951, %v1039, 0.0
    %v1056 = vsel %vm952, %v1040, 0.0
    %v1057 = vsel %vm953, %v1041, 0.0
    %v1058 = vsel %vm954, %v1042, 0.0
    %v1059 = vsel %vm955, %v1043, 0.0
    %v1060 = vsel %vm956, %v1044, 0.0
    %v1061 = vsel %vm957, %v1045, 0.0
    %v1062 = vsel %vm958, %v1046, 0.0
    %v1063 = vsel %vm959, %v1047, 0.0
    %v1064 = vsel %vm960, %v1048, 0.0
    %v1065 = vsel %vm961, %v1049, 0.0
    %v1066 = vsel %vm962, %v1050, 0.0
    %v1067 = vadd.f32 %v1051, %v1052
    %v1068 = vadd.f32 %v1067, %v1053
    %v1069 = vadd.f32 %v1068, %v1054
    %v1070 = vadd.f32 %v1069, %v1055
    %v1071 = vadd.f32 %v1070, %v1056
    %v1072 = vadd.f32 %v1071, %v1057
    %v1073 = vadd.f32 %v1072, %v1058
    %v1074 = vadd.f32 %v1073, %v1059
    %v1075 = vadd.f32 %v1074, %v1060
    %v1076 = vadd.f32 %v1075, %v1061
    %v1077 = vadd.f32 %v1076, %v1062
    %v1078 = vadd.f32 %v1077, %v1063
    %v1079 = vadd.f32 %v1078, %v1064
    %v1080 = vadd.f32 %v1079, %v1065
    %v1081 = vadd.f32 %v1080, %v1066
    %1082 = vadd.xlane.f32.xlu0 %v1081
    %v1083 = vpop.xlane.xlu0 %1082
    %v1084 = vrot.slane %v1083, 4
    %v1085 = vadd.f32 %v1083, %v1084
    %v1086 = vrot.slane %v1085, 2
    %v1087 = vadd.f32 %v1085, %v1086
    %v1088 = vrot.slane %v1087, 1
    %v1089 = vadd.f32 %v1087, %v1088
    %s1090 = vtos %v1089
    %s1091 = sadd.f32 %s1090, 128.0
    %s1092 = smul.f32 %s1002, 0.0051
    %s1093 = sadd.f32 %s1091, %s1092
    %s1094 = scalar_lea.smem [#allocation13], 0
    %1095 = sst [smem:[%s1094]] %s1093
    // Predicated region
    $region58: #{tpu_custom_call.1} parent=1 // pred_check
      _
    $region59: #{tpu_custom_call.1} parent=1 // pred_check_branch
      %1097 = sbr.rel (0) target = $region61
    $region60: #{tpu_custom_call.1} parent=1 // pred_region
      %1099 = vsyncadd [#allocation4], 0
      %s1100 = sshll.u32 [#allocation12], 4
      %s1101 = int_to_ptr.vmem [resolvable:$true] %s1100
      %s1102 = sshll.u32 %s9, 4
      %s1103 = int_to_ptr.hbm [resolvable:$true] %s1102
      %1108 = dma.vmem_to_hbm [thread:$0]  %s1101, 256, %s1103, [#allocation4], 128, 128, 8
    $region61: #{tpu_custom_call.1} parent=1 // pred_fallthru
      _
    // Predicated region
    $region62: #{tpu_custom_call.1} parent=1 // pred_check
      _
    $region63: #{tpu_custom_call.1} parent=1 // pred_check_branch
      %1110 = sbr.rel (0) target = $region65
    $region64: #{tpu_custom_call.1} parent=1 // pred_region
      %1112 = vsyncadd [#allocation5], 0
      %s1114 = sshll.u32 %s10, 4
      %s1115 = int_to_ptr.hbm [resolvable:$true] %s1114
      %1117 = dma.smem_to_hbm [#allocation13], 16, %s1115, [#allocation5]
    $region65: #{tpu_custom_call.1} parent=1 // pred_fallthru
      _
    // Predicated region
    $region66: #{tpu_custom_call.1} parent=1 // pred_check
      _
    $region67: #{tpu_custom_call.1} parent=1 // pred_check_branch
      %1119 = sbr.rel (0) target = $region69
    $region68: #{tpu_custom_call.1} parent=1 // pred_region
      %1121 = dma.done [#allocation4], 256
    $region69: #{tpu_custom_call.1} parent=1 // pred_fallthru
      _
    // Predicated region
    $region70: #{tpu_custom_call.1} parent=1 // pred_check
      _
    $region71: #{tpu_custom_call.1} parent=1 // pred_check_branch
      %1123 = sbr.rel (0) target = $region73
    $region72: #{tpu_custom_call.1} parent=1 // pred_region
      %1125 = dma.done [#allocation5], 16
    $region73: #{tpu_custom_call.1} parent=1 // pred_fallthru
      _
    %1126 = sfence
    %1127 = vsyncpa [#allocation3], 1
    %1128 = vsyncpa [#allocation7], 1
    %1129 = vsyncpa [#allocation10], 1
    %1130 = vsyncpa [#allocation4], 1
    %1131 = vsyncpa [#allocation5], 1

</llo_original>
